<compile_context>
chip_gen: v5e
topology: v5e:2x2
jax: 0.10.0
libtpu: 0.0.40
codegen_flags: <defaults>
</compile_context>

<pallas_src>
import jax
import jax.numpy as jnp
from jax.experimental import pallas as pl
from jax.experimental.pallas import tpu as pltpu

_LANE = 128
_SINGLE_BLOCK_MAX_BYTES = 512 * 1024        # whole slab as one block below this
_TARGET_BLOCK_BYTES = 6 * 1024 * 1024       # ~6 MiB tiles on the grid path
_VMEM_LIMIT_BYTES = 48 * 1024 * 1024        # 4 x 6 MiB buffers + headroom,
                                            # < 64 MiB physical VMEM on v7x


def _relu_kernel(x_ref, o_ref):
    # Elementwise ReLU on the current VMEM tile (VPU op).
    o_ref[...] = jnp.maximum(x_ref[...], jnp.zeros((), dtype=x_ref.dtype))


def _sublane_floor(dtype) -> int:
    # Sub-32-bit dtypes pack 2x/4x along sublanes: (8,128) f32, (16,128) bf16,
    # (32,128) int8/fp8.
    itemsize = jnp.dtype(dtype).itemsize
    return {4: 8, 2: 16, 1: 32}.get(itemsize, 8)


def _pick_cols(n: int, sublane: int):
    """Largest lane-dense column count (multiple of 128) dividing n exactly."""
    best = None
    for c in (2048, 1024, 512, 256, 128):
        if n % c == 0:
            if best is None:
                best = c
            if n // c >= sublane:
                return c
    return best  # None if n is not a multiple of 128


def _pick_tile_rows(rows: int, cols: int, itemsize: int, sublane: int):
    """Tile row count for the 2D grid path, or None for the single-block path."""
    nbytes = rows * cols * itemsize
    # Guard: never hand the grid path a slab with fewer than 2 sublane-groups.
    if nbytes <= _SINGLE_BLOCK_MAX_BYTES or rows < 2 * sublane:
        return None
    target_r = max(
        sublane, (_TARGET_BLOCK_BYTES // (cols * itemsize) // sublane) * sublane)
    # Cap so there are >= 2 grid steps (pipeline overlap + v7x megacore).
    half_r = max(sublane, (rows // 2 // sublane) * sublane)
    return min(target_r, half_r)


def _pick_tile_1d(n: int, itemsize: int, sublane: int):
    """Tile length for the ragged 1D grid path, or None for single-block."""
    nbytes = n * itemsize
    if nbytes <= _SINGLE_BLOCK_MAX_BYTES:
        return None
    blk = sublane * _LANE                      # lane-aligned granularity
    target = max(blk, (_TARGET_BLOCK_BYTES // itemsize // blk) * blk)
    half = max(blk, (n // 2 // blk) * blk)     # >= 2 grid steps
    return min(target, half)


def _relu_single_block(x):
    # grid=(): one full-array block, explicitly pinned VMEM-resident.  No
    # per-step DMA/descriptor overhead; full dims bypass the (8,128) rule.
    return pl.pallas_call(
        _relu_kernel,
        out_shape=jax.ShapeDtypeStruct(x.shape, x.dtype),
        in_specs=[pl.BlockSpec(memory_space=pltpu.MemorySpace.VMEM)],
        out_specs=pl.BlockSpec(memory_space=pltpu.MemorySpace.VMEM),
    )(x)


def _relu_2d_grid(x2d, tile_r):
    rows, cols = x2d.shape
    return pl.pallas_call(
        _relu_kernel,
        out_shape=jax.ShapeDtypeStruct((rows, cols), x2d.dtype),
        grid=(pl.cdiv(rows, tile_r),),
        in_specs=[pl.BlockSpec((tile_r, cols), lambda i: (i, 0))],
        out_specs=pl.BlockSpec((tile_r, cols), lambda i: (i, 0)),
        compiler_params=pltpu.CompilerParams(
            dimension_semantics=("parallel",),
            vmem_limit_bytes=_VMEM_LIMIT_BYTES),
    )(x2d)


def _relu_1d_grid(x_flat, tile):
    n = x_flat.shape[0]
    return pl.pallas_call(
        _relu_kernel,
        out_shape=jax.ShapeDtypeStruct((n,), x_flat.dtype),
        grid=(pl.cdiv(n, tile),),
        in_specs=[pl.BlockSpec((tile,), lambda i: (i,))],
        out_specs=pl.BlockSpec((tile,), lambda i: (i,)),
        compiler_params=pltpu.CompilerParams(
            dimension_semantics=("parallel",),
            vmem_limit_bytes=_VMEM_LIMIT_BYTES),
    )(x_flat)


def _nonlinearity_impl(x: jax.Array) -> jax.Array:
    orig_shape = x.shape
    n = x.size
    if n == 0:
        return x

    dtype = x.dtype
    itemsize = jnp.dtype(dtype).itemsize
    sublane = _sublane_floor(dtype)

    cols = _pick_cols(n, sublane)
    if cols is not None:
        # Exact factorization: reshapes are metadata-only under jit, no pad,
        # no post-kernel slice -> kernel traffic is the only HBM traffic.
        rows = n // cols
        x2d = x.reshape(rows, cols)
        tile_r = _pick_tile_rows(rows, cols, itemsize, sublane)
        out2d = (_relu_single_block(x2d) if tile_r is None
                 else _relu_2d_grid(x2d, tile_r))
        return out2d.reshape(orig_shape)

    # Ragged fallback (n not a multiple of 128): no jnp.pad / output slice —
    # run directly over the flat view; Pallas masks the partial edge block,
    # so there is no extra HBM pass.
    x_flat = x.reshape(-1)
    tile = _pick_tile_1d(n, itemsize, sublane)
    out_flat = (_relu_single_block(x_flat) if tile is None
                else _relu_1d_grid(x_flat, tile))
    return out_flat.reshape(orig_shape)


# jit the whole wrapper so contiguous reshapes stay metadata-only.
nonlinearity = jax.jit(_nonlinearity_impl)


if __name__ == "__main__":
    key = jax.random.PRNGKey(0)
    # Small NCHW-style input consistent with a typical conv-net activation.
    x = jax.random.normal(key, (2, 4, 16, 16), dtype=jnp.float32)

    y = nonlinearity(x)
    jax.block_until_ready(y)

    # Correctness check against the reference semantics of F.relu.
    y_ref = jnp.maximum(x, 0.0)
    assert y.shape == x.shape and y.dtype == x.dtype
    assert bool(jnp.all(y == y_ref))

    # Ragged shape (element count not a multiple of 128) exercises the
    # pad-free fallback path.
    x2 = jax.random.normal(jax.random.PRNGKey(1), (3, 5, 7), dtype=jnp.float32)
    y2 = nonlinearity(x2)
    jax.block_until_ready(y2)
    assert y2.shape == x2.shape and y2.dtype == x2.dtype
    assert bool(jnp.all(y2 == jnp.maximum(x2, 0.0)))

    print("KERNEL_OK")
</pallas_src>

<mosaic_0001>
module attributes {stable_mosaic.version = 11 : i64} {
  func.func @_relu_kernel(%arg0: memref<8x256xf32, #tpu.memory_space<vmem>>, %arg1: memref<8x256xf32, #tpu.memory_space<vmem>>) attributes {dimension_semantics = [], scalar_prefetch = 0 : i64, scratch_operands = 0 : i64, tpu.core_type = #tpu.core_type<tc>} {
    %c0 = arith.constant 0 : index
    %c0_0 = arith.constant 0 : index
    %0 = vector.load %arg0[%c0, %c0_0] : memref<8x256xf32, #tpu.memory_space<vmem>>, vector<8x256xf32>
    %cst = arith.constant 0.000000e+00 : f32
    %1 = vector.broadcast %cst : f32 to vector<8x256xf32>
    %2 = arith.maximumf %0, %1 : vector<8x256xf32>
    %c0_1 = arith.constant 0 : index
    %c0_2 = arith.constant 0 : index
    %3 = vector.load %arg1[%c0_1, %c0_2] : memref<8x256xf32, #tpu.memory_space<vmem>>, vector<8x256xf32>
    tpu.vector_store %arg1[%c0_1, %c0_2], %2 {strides = array<i32>} : memref<8x256xf32, #tpu.memory_space<vmem>>, vector<8x256xf32>,
    return
  }
}

</mosaic_0001>

<llo_original>
// kernel: _nonlinearity_impl.1
$region0: #{_nonlinearity_impl.1}
  #allocation0 [shape = 'u32[]', space=smem, size = 0x4, offset = 0x4, fixed_abs, tag = 'smem constant byte address 0x4 - core index']
  #allocation1 [shape = 'u32[72,128]{1,0:T(1,128)}', space=vmem, size = 0x9000, scoped, tag = 'internal scratch']
  %s0 = inlined_call_operand.vmem [shape: f32[8,256], index: 0, kind: input, shape index: {}]
  %s1 = inlined_call_operand.vmem [shape: f32[8,256], index: 1, kind: output, shape index: {}]
  %s2 = sld [smem:[#allocation0]]
  $region14: #{_nonlinearity_impl.1} parent=0
    _
  %s4 = ssub.s32 1, %s2
  %s5 = scalar_select 0, %s4, %s2
  // Predicated region
  $region2: #{_nonlinearity_impl.1} parent=0 // pred_check
    _
  $region3: #{_nonlinearity_impl.1} parent=0 // pred_check_branch
    %7 = sbr.rel (0) target = $region5
  $region4: #{_nonlinearity_impl.1} parent=0 // pred_region
    _
  $region5: #{_nonlinearity_impl.1} parent=0 // pred_fallthru
    _
  %v8 = vld [vmem:[%s0] sm:$0xff]
  %v9 = vld [vmem:[%s0 + $0x8] sm:$0xff]
  %v10 = vmax.f32 %v8, 0.0
  %v11 = vmax.f32 %v9, 0.0
  %12 = vst [vmem:[%s1] sm:$0xff] %v10
  %13 = vst [vmem:[%s1 + $0x8] sm:$0xff] %v11
  // Predicated region
  $region6: #{_nonlinearity_impl.1} parent=0 // pred_check
    _
  $region7: #{_nonlinearity_impl.1} parent=0 // pred_check_branch
    %15 = sbr.rel (0) target = $region9
  $region8: #{_nonlinearity_impl.1} parent=0 // pred_region
    _
  $region9: #{_nonlinearity_impl.1} parent=0 // pred_fallthru
    _
  // Predicated region
  $region10: #{_nonlinearity_impl.1} parent=0 // pred_check
    _
  $region11: #{_nonlinearity_impl.1} parent=0 // pred_check_branch
    %17 = sbr.rel (0) target = $region13
  $region12: #{_nonlinearity_impl.1} parent=0 // pred_region
    _
  $region13: #{_nonlinearity_impl.1} parent=0 // pred_fallthru
    _

</llo_original>
